<compile_context>
chip_gen: v6e
topology: v6e:2x2x1
jax: 0.10.0
libtpu: 0.0.40
codegen_flags: <defaults>
</compile_context>

<pallas_src>
import jax
import jax.numpy as jnp
from jax import lax
from jax.experimental import pallas as pl
from jax.experimental.pallas import tpu as pltpu

MAP_SIZE = 16          # H = W = MAP_SIZE  (the undefined global in the source)
FEATURE_SIZE = 4
NUM_ACTIONS = 8
BN_EPS = 1e-5
HIDDEN = 128

# SMEM scalar-vector layout
_IDX_GAMMA = 0
_IDX_BETA = 1
_IDX_B2 = 2
_IDX_WA = 4                        # 8 action-channel 1x1-conv weights
_IDX_WS = _IDX_WA + NUM_ACTIONS    # 4 state-channel 1x1-conv weights
_N_SCAL = _IDX_WS + FEATURE_SIZE   # 16


def discriminator_kernel(scal_ref, x_a_ref, x_s_ref, w_ref, o_ref):
    # scal_ref : SMEM (16,) f32 = [gamma, beta, b2, pad, wa(8), ws(4)]
    # x_a_ref  : VMEM (B, A,  HW) f32
    # x_s_ref  : VMEM (B, Cs, HW) f32
    # w_ref    : VMEM (HW+2, 128) f32 = [w1 (HW,128) ; b1 (1,128) ; w2^T (1,128)]
    # o_ref    : VMEM (B, 1) f32
    _, na, hw = x_a_ref.shape
    ns = x_s_ref.shape[1]

    gamma = scal_ref[_IDX_GAMMA]
    beta = scal_ref[_IDX_BETA]
    b2 = scal_ref[_IDX_B2]

    # 1x1 conv as 12 scalar-broadcast multiply-adds over lane-dense (B, HW) slabs.
    # The conv bias is intentionally omitted: BN subtracts the batch mean, so a
    # per-tensor constant bias cancels exactly.
    conv = x_a_ref[:, 0, :] * scal_ref[_IDX_WA]
    for a in range(1, na):
        conv += x_a_ref[:, a, :] * scal_ref[_IDX_WA + a]
    for c in range(ns):
        conv += x_s_ref[:, c, :] * scal_ref[_IDX_WS + c]

    # BatchNorm2d(1), training mode (biased batch stats), centered two-pass variance.
    n = conv.shape[0] * conv.shape[1]
    mean = jnp.sum(conv) / n
    centered = conv - mean
    var = jnp.sum(centered * centered) / n
    scale = gamma * lax.rsqrt(var + BN_EPS)
    normed = centered * scale + beta                      # (B, HW)

    # Linear(HW -> 128) + ReLU on the MXU.
    w1 = w_ref[0:hw, :]                                   # (HW, 128) static view
    b1 = w_ref[hw:hw + 1, :]                              # (1, 128)
    h = jnp.dot(normed, w1, preferred_element_type=jnp.float32)
    h = jnp.maximum(h + b1, 0.0)                          # (B, 128)

    # Linear(128 -> 1): VPU multiply + lane reduce (avoid N=1 MXU matmul).
    w2t = w_ref[hw + 1:hw + 2, :]                         # (1, 128)
    logit = jnp.sum(h * w2t, axis=-1, keepdims=True) + b2  # (B, 1)

    # Sigmoid: exp + reciprocal on the EUP.
    o_ref[...] = pl.reciprocal(1.0 + jnp.exp(-logit), approx=True)


def init_params(key, feature_size=FEATURE_SIZE, num_actions=NUM_ACTIONS,
                map_size=MAP_SIZE):
    c = num_actions + feature_size
    hw = map_size * map_size
    k = jax.random.split(key, 6)
    return {
        # conv weight order: action channels first, then state channels (torch.cat order)
        "wc": jax.random.normal(k[0], (c,), jnp.float32) * 0.1,
        "bc": jax.random.normal(k[1], (), jnp.float32) * 0.1,
        "gamma": jnp.ones((), jnp.float32),    # BatchNorm2d default init
        "beta": jnp.zeros((), jnp.float32),
        "w1": jax.random.normal(k[2], (hw, 128), jnp.float32) * (1.0 / hw ** 0.5),
        "b1": jax.random.normal(k[3], (1, 128), jnp.float32) * 0.01,
        "w2": jax.random.normal(k[4], (128, 1), jnp.float32) * (1.0 / 128 ** 0.5),
        "b2": jax.random.normal(k[5], (), jnp.float32) * 0.01,
    }


def pack_params(params, num_actions=NUM_ACTIONS, feature_size=FEATURE_SIZE):
    """One-time packing of the tiny per-channel scalars into a (16,) SMEM vector
    and w1/b1/w2^T into a single (HW+2, 128) VMEM operand."""
    wc = params["wc"].reshape(-1).astype(jnp.float32)
    scal = jnp.zeros((_N_SCAL,), jnp.float32)
    scal = scal.at[_IDX_GAMMA].set(params["gamma"].astype(jnp.float32))
    scal = scal.at[_IDX_BETA].set(params["beta"].astype(jnp.float32))
    scal = scal.at[_IDX_B2].set(params["b2"].astype(jnp.float32))
    scal = scal.at[_IDX_WA:_IDX_WA + num_actions].set(wc[:num_actions])
    scal = scal.at[_IDX_WS:_IDX_WS + feature_size].set(wc[num_actions:num_actions + feature_size])

    w_packed = jnp.concatenate(
        [params["w1"].astype(jnp.float32),
         params["b1"].reshape(1, -1).astype(jnp.float32),
         params["w2"].reshape(1, -1).astype(jnp.float32)],   # (128,1) -> (1,128)
        axis=0)                                              # (HW+2, 128)
    return scal, w_packed


def discriminator_forward(action_out, states, params):
    """action_out: (B, H, W, num_actions); states: (B, feature_size, H, W)."""
    B, H, W, A = action_out.shape
    Cs = states.shape[1]
    HW = H * W

    # Layout plumbing only: channels onto sublanes, HW onto lanes.
    x_a = jnp.transpose(action_out, (0, 3, 1, 2)).reshape(B, A, HW).astype(jnp.float32)
    x_s = states.reshape(B, Cs, HW).astype(jnp.float32)

    scal, w_packed = pack_params(params)

    flops = (2 * B * HW * (A + Cs)        # 1x1 conv
             + 8 * B * HW                 # BN stats + normalize
             + 2 * B * HW * HIDDEN        # Linear 1
             + 2 * B * HIDDEN)            # Linear 2 (lane reduce)
    bytes_accessed = 4 * (x_a.size + x_s.size + w_packed.size + scal.size + B)

    vmem = pl.BlockSpec(memory_space=pltpu.MemorySpace.VMEM)
    smem = pl.BlockSpec(memory_space=pltpu.MemorySpace.SMEM)

    out = pl.pallas_call(
        discriminator_kernel,
        out_shape=jax.ShapeDtypeStruct((B, 1), jnp.float32),
        in_specs=[smem, vmem, vmem, vmem],
        out_specs=vmem,
        cost_estimate=pl.CostEstimate(
            flops=flops, transcendentals=2 * B, bytes_accessed=bytes_accessed),
    )(scal, x_a, x_s, w_packed)
    return out


def discriminator_reference(action_out, states, params):
    """Pure-JAX reference mirroring the PyTorch forward (training-mode BN)."""
    B, H, W, A = action_out.shape
    x_a = jnp.transpose(action_out, (0, 3, 1, 2)).reshape(B, A, -1)
    x_s = states.reshape(B, states.shape[1], -1)
    cat = jnp.concatenate([x_a, x_s], axis=1).astype(jnp.float32)   # (B, C, HW)
    conv = jnp.einsum('bch,c->bh', cat, params["wc"]) + params["bc"]
    mean = jnp.mean(conv)
    var = jnp.mean((conv - mean) ** 2)
    normed = (conv - mean) / jnp.sqrt(var + BN_EPS)
    normed = normed * params["gamma"] + params["beta"]
    h = jnp.maximum(normed @ params["w1"] + params["b1"], 0.0)
    logit = h @ params["w2"] + params["b2"]
    return jax.nn.sigmoid(logit)


if __name__ == "__main__":
    B = 2
    key = jax.random.PRNGKey(0)
    k_act, k_st, k_par = jax.random.split(key, 3)

    action_out = jax.random.normal(
        k_act, (B, MAP_SIZE, MAP_SIZE, NUM_ACTIONS), jnp.float32)
    states = jax.random.normal(
        k_st, (B, FEATURE_SIZE, MAP_SIZE, MAP_SIZE), jnp.float32)
    params = init_params(k_par)

    out = discriminator_forward(action_out, states, params)
    out = jax.block_until_ready(out)

    ref = discriminator_reference(action_out, states, params)
    assert out.shape == (B, 1), out.shape
    # slightly loose tolerance: sigmoid uses the EUP approx reciprocal
    assert jnp.allclose(out, ref, atol=2e-3, rtol=2e-3), (out, ref)

    print("KERNEL_OK")
</pallas_src>

<mosaic_0001>
module attributes {stable_mosaic.version = 11 : i64} {
  func.func @discriminator_kernel(%arg0: memref<16xf32, #tpu.memory_space<smem>>, %arg1: memref<2x8x256xf32, #tpu.memory_space<vmem>>, %arg2: memref<2x4x256xf32, #tpu.memory_space<vmem>>, %arg3: memref<258x128xf32, #tpu.memory_space<vmem>>, %arg4: memref<2x1xf32, #tpu.memory_space<vmem>>) attributes {dimension_semantics = [], scalar_prefetch = 0 : i64, scratch_operands = 0 : i64, tpu.core_type = #tpu.core_type<tc>} {
    %c0 = arith.constant 0 : index
    %0 = memref.load %arg0[%c0] : memref<16xf32, #tpu.memory_space<smem>>
    %c1 = arith.constant 1 : index
    %1 = memref.load %arg0[%c1] : memref<16xf32, #tpu.memory_space<smem>>
    %c2 = arith.constant 2 : index
    %2 = memref.load %arg0[%c2] : memref<16xf32, #tpu.memory_space<smem>>
    %c0_0 = arith.constant 0 : index
    %c0_1 = arith.constant 0 : index
    %c0_2 = arith.constant 0 : index
    %3 = vector.load %arg1[%c0_0, %c0_1, %c0_2] : memref<2x8x256xf32, #tpu.memory_space<vmem>>, vector<2x1x256xf32>
    %4 = vector.shape_cast %3 : vector<2x1x256xf32> to vector<2x256xf32>
    %c4 = arith.constant 4 : index
    %5 = memref.load %arg0[%c4] : memref<16xf32, #tpu.memory_space<smem>>
    %6 = vector.broadcast %5 : f32 to vector<2x256xf32>
    %7 = arith.mulf %4, %6 : vector<2x256xf32>
    %c0_3 = arith.constant 0 : index
    %c1_4 = arith.constant 1 : index
    %c0_5 = arith.constant 0 : index
    %8 = vector.load %arg1[%c0_3, %c1_4, %c0_5] : memref<2x8x256xf32, #tpu.memory_space<vmem>>, vector<2x1x256xf32>
    %9 = vector.shape_cast %8 : vector<2x1x256xf32> to vector<2x256xf32>
    %c5 = arith.constant 5 : index
    %10 = memref.load %arg0[%c5] : memref<16xf32, #tpu.memory_space<smem>>
    %11 = vector.broadcast %10 : f32 to vector<2x256xf32>
    %12 = arith.mulf %9, %11 : vector<2x256xf32>
    %13 = arith.addf %7, %12 : vector<2x256xf32>
    %c0_6 = arith.constant 0 : index
    %c2_7 = arith.constant 2 : index
    %c0_8 = arith.constant 0 : index
    %14 = vector.load %arg1[%c0_6, %c2_7, %c0_8] : memref<2x8x256xf32, #tpu.memory_space<vmem>>, vector<2x1x256xf32>
    %15 = vector.shape_cast %14 : vector<2x1x256xf32> to vector<2x256xf32>
    %c6 = arith.constant 6 : index
    %16 = memref.load %arg0[%c6] : memref<16xf32, #tpu.memory_space<smem>>
    %17 = vector.broadcast %16 : f32 to vector<2x256xf32>
    %18 = arith.mulf %15, %17 : vector<2x256xf32>
    %19 = arith.addf %13, %18 : vector<2x256xf32>
    %c0_9 = arith.constant 0 : index
    %c3 = arith.constant 3 : index
    %c0_10 = arith.constant 0 : index
    %20 = vector.load %arg1[%c0_9, %c3, %c0_10] : memref<2x8x256xf32, #tpu.memory_space<vmem>>, vector<2x1x256xf32>
    %21 = vector.shape_cast %20 : vector<2x1x256xf32> to vector<2x256xf32>
    %c7 = arith.constant 7 : index
    %22 = memref.load %arg0[%c7] : memref<16xf32, #tpu.memory_space<smem>>
    %23 = vector.broadcast %22 : f32 to vector<2x256xf32>
    %24 = arith.mulf %21, %23 : vector<2x256xf32>
    %25 = arith.addf %19, %24 : vector<2x256xf32>
    %c0_11 = arith.constant 0 : index
    %c4_12 = arith.constant 4 : index
    %c0_13 = arith.constant 0 : index
    %26 = vector.load %arg1[%c0_11, %c4_12, %c0_13] : memref<2x8x256xf32, #tpu.memory_space<vmem>>, vector<2x1x256xf32>
    %27 = vector.shape_cast %26 : vector<2x1x256xf32> to vector<2x256xf32>
    %c8 = arith.constant 8 : index
    %28 = memref.load %arg0[%c8] : memref<16xf32, #tpu.memory_space<smem>>
    %29 = vector.broadcast %28 : f32 to vector<2x256xf32>
    %30 = arith.mulf %27, %29 : vector<2x256xf32>
    %31 = arith.addf %25, %30 : vector<2x256xf32>
    %c0_14 = arith.constant 0 : index
    %c5_15 = arith.constant 5 : index
    %c0_16 = arith.constant 0 : index
    %32 = vector.load %arg1[%c0_14, %c5_15, %c0_16] : memref<2x8x256xf32, #tpu.memory_space<vmem>>, vector<2x1x256xf32>
    %33 = vector.shape_cast %32 : vector<2x1x256xf32> to vector<2x256xf32>
    %c9 = arith.constant 9 : index
    %34 = memref.load %arg0[%c9] : memref<16xf32, #tpu.memory_space<smem>>
    %35 = vector.broadcast %34 : f32 to vector<2x256xf32>
    %36 = arith.mulf %33, %35 : vector<2x256xf32>
    %37 = arith.addf %31, %36 : vector<2x256xf32>
    %c0_17 = arith.constant 0 : index
    %c6_18 = arith.constant 6 : index
    %c0_19 = arith.constant 0 : index
    %38 = vector.load %arg1[%c0_17, %c6_18, %c0_19] : memref<2x8x256xf32, #tpu.memory_space<vmem>>, vector<2x1x256xf32>
    %39 = vector.shape_cast %38 : vector<2x1x256xf32> to vector<2x256xf32>
    %c10 = arith.constant 10 : index
    %40 = memref.load %arg0[%c10] : memref<16xf32, #tpu.memory_space<smem>>
    %41 = vector.broadcast %40 : f32 to vector<2x256xf32>
    %42 = arith.mulf %39, %41 : vector<2x256xf32>
    %43 = arith.addf %37, %42 : vector<2x256xf32>
    %c0_20 = arith.constant 0 : index
    %c7_21 = arith.constant 7 : index
    %c0_22 = arith.constant 0 : index
    %44 = vector.load %arg1[%c0_20, %c7_21, %c0_22] : memref<2x8x256xf32, #tpu.memory_space<vmem>>, vector<2x1x256xf32>
    %45 = vector.shape_cast %44 : vector<2x1x256xf32> to vector<2x256xf32>
    %c11 = arith.constant 11 : index
    %46 = memref.load %arg0[%c11] : memref<16xf32, #tpu.memory_space<smem>>
    %47 = vector.broadcast %46 : f32 to vector<2x256xf32>
    %48 = arith.mulf %45, %47 : vector<2x256xf32>
    %49 = arith.addf %43, %48 : vector<2x256xf32>
    %c0_23 = arith.constant 0 : index
    %c0_24 = arith.constant 0 : index
    %c0_25 = arith.constant 0 : index
    %50 = vector.load %arg2[%c0_23, %c0_24, %c0_25] : memref<2x4x256xf32, #tpu.memory_space<vmem>>, vector<2x1x256xf32>
    %51 = vector.shape_cast %50 : vector<2x1x256xf32> to vector<2x256xf32>
    %c12 = arith.constant 12 : index
    %52 = memref.load %arg0[%c12] : memref<16xf32, #tpu.memory_space<smem>>
    %53 = vector.broadcast %52 : f32 to vector<2x256xf32>
    %54 = arith.mulf %51, %53 : vector<2x256xf32>
    %55 = arith.addf %49, %54 : vector<2x256xf32>
    %c0_26 = arith.constant 0 : index
    %c1_27 = arith.constant 1 : index
    %c0_28 = arith.constant 0 : index
    %56 = vector.load %arg2[%c0_26, %c1_27, %c0_28] : memref<2x4x256xf32, #tpu.memory_space<vmem>>, vector<2x1x256xf32>
    %57 = vector.shape_cast %56 : vector<2x1x256xf32> to vector<2x256xf32>
    %c13 = arith.constant 13 : index
    %58 = memref.load %arg0[%c13] : memref<16xf32, #tpu.memory_space<smem>>
    %59 = vector.broadcast %58 : f32 to vector<2x256xf32>
    %60 = arith.mulf %57, %59 : vector<2x256xf32>
    %61 = arith.addf %55, %60 : vector<2x256xf32>
    %c0_29 = arith.constant 0 : index
    %c2_30 = arith.constant 2 : index
    %c0_31 = arith.constant 0 : index
    %62 = vector.load %arg2[%c0_29, %c2_30, %c0_31] : memref<2x4x256xf32, #tpu.memory_space<vmem>>, vector<2x1x256xf32>
    %63 = vector.shape_cast %62 : vector<2x1x256xf32> to vector<2x256xf32>
    %c14 = arith.constant 14 : index
    %64 = memref.load %arg0[%c14] : memref<16xf32, #tpu.memory_space<smem>>
    %65 = vector.broadcast %64 : f32 to vector<2x256xf32>
    %66 = arith.mulf %63, %65 : vector<2x256xf32>
    %67 = arith.addf %61, %66 : vector<2x256xf32>
    %c0_32 = arith.constant 0 : index
    %c3_33 = arith.constant 3 : index
    %c0_34 = arith.constant 0 : index
    %68 = vector.load %arg2[%c0_32, %c3_33, %c0_34] : memref<2x4x256xf32, #tpu.memory_space<vmem>>, vector<2x1x256xf32>
    %69 = vector.shape_cast %68 : vector<2x1x256xf32> to vector<2x256xf32>
    %c15 = arith.constant 15 : index
    %70 = memref.load %arg0[%c15] : memref<16xf32, #tpu.memory_space<smem>>
    %71 = vector.broadcast %70 : f32 to vector<2x256xf32>
    %72 = arith.mulf %69, %71 : vector<2x256xf32>
    %73 = arith.addf %67, %72 : vector<2x256xf32>
    %74 = vector.shape_cast %73 : vector<2x256xf32> to vector<1x2x256xf32>
    %cst = arith.constant dense<0.000000e+00> : vector<1xf32>
    %75 = vector.multi_reduction <add>, %74, %cst [1, 2] : vector<1x2x256xf32> to vector<1xf32>
    %76 = vector.shape_cast %75 : vector<1xf32> to vector<1x1x1xf32>
    %77 = vector.extract %76[0, 0, 0] : f32 from vector<1x1x1xf32>
    %cst_35 = arith.constant 5.120000e+02 : f32
    %78 = arith.divf %77, %cst_35 : f32
    %79 = vector.broadcast %78 : f32 to vector<2x256xf32>
    %80 = arith.subf %73, %79 : vector<2x256xf32>
    %81 = arith.mulf %80, %80 : vector<2x256xf32>
    %82 = vector.shape_cast %81 : vector<2x256xf32> to vector<1x2x256xf32>
    %cst_36 = arith.constant dense<0.000000e+00> : vector<1xf32>
    %83 = vector.multi_reduction <add>, %82, %cst_36 [1, 2] : vector<1x2x256xf32> to vector<1xf32>
    %84 = vector.shape_cast %83 : vector<1xf32> to vector<1x1x1xf32>
    %85 = vector.extract %84[0, 0, 0] : f32 from vector<1x1x1xf32>
    %cst_37 = arith.constant 5.120000e+02 : f32
    %86 = arith.divf %85, %cst_37 : f32
    %cst_38 = arith.constant 9.99999974E-6 : f32
    %87 = arith.addf %86, %cst_38 : f32
    %88 = math.rsqrt %87 : f32
    %89 = arith.mulf %0, %88 : f32
    %90 = vector.broadcast %89 : f32 to vector<2x256xf32>
    %91 = arith.mulf %80, %90 : vector<2x256xf32>
    %92 = vector.broadcast %1 : f32 to vector<2x256xf32>
    %93 = arith.addf %91, %92 : vector<2x256xf32>
    %c0_39 = arith.constant 0 : index
    %c0_40 = arith.constant 0 : index
    %94 = vector.load %arg3[%c0_39, %c0_40] : memref<258x128xf32, #tpu.memory_space<vmem>>, vector<256x128xf32>
    %c256 = arith.constant 256 : index
    %c0_41 = arith.constant 0 : index
    %95 = vector.load %arg3[%c256, %c0_41] : memref<258x128xf32, #tpu.memory_space<vmem>>, vector<1x128xf32>
    %cst_42 = arith.constant dense<0.000000e+00> : vector<2x128xf32>
    %96 = tpu.matmul %93, %94, %cst_42 {dimension_numbers = #tpu.dot_dimension_numbers<[1], [0], [0], [1], [0, 0, 1, 1], [], []>} : vector<2x256xf32>, vector<256x128xf32>, vector<2x128xf32> -> vector<2x128xf32>
    %97 = vector.broadcast %95 : vector<1x128xf32> to vector<2x128xf32>
    %98 = arith.addf %96, %97 : vector<2x128xf32>
    %cst_43 = arith.constant 0.000000e+00 : f32
    %99 = vector.broadcast %cst_43 : f32 to vector<2x128xf32>
    %100 = arith.maximumf %98, %99 : vector<2x128xf32>
    %c257 = arith.constant 257 : index
    %c0_44 = arith.constant 0 : index
    %101 = vector.load %arg3[%c257, %c0_44] : memref<258x128xf32, #tpu.memory_space<vmem>>, vector<1x128xf32>
    %102 = vector.broadcast %101 : vector<1x128xf32> to vector<2x128xf32>
    %103 = arith.mulf %100, %102 : vector<2x128xf32>
    %cst_45 = arith.constant dense<0.000000e+00> : vector<2xf32>
    %104 = vector.multi_reduction <add>, %103, %cst_45 [1] : vector<2x128xf32> to vector<2xf32>
    %105 = vector.shape_cast %104 : vector<2xf32> to vector<2x1xf32>
    %106 = vector.broadcast %2 : f32 to vector<2x1xf32>
    %107 = arith.addf %105, %106 : vector<2x1xf32>
    %cst_46 = arith.constant 0.000000e+00 : f32
    %108 = vector.broadcast %cst_46 : f32 to vector<2x1xf32>
    %109 = arith.subf %108, %107 : vector<2x1xf32>
    %110 = math.exp %109 : vector<2x1xf32>
    %cst_47 = arith.constant 1.000000e+00 : f32
    %111 = vector.broadcast %cst_47 : f32 to vector<2x1xf32>
    %112 = arith.addf %111, %110 : vector<2x1xf32>
    %113 = tpu.reciprocal %112 {approx = true} : vector<2x1xf32> -> vector<2x1xf32>
    %c0_48 = arith.constant 0 : index
    %c0_49 = arith.constant 0 : index
    %114 = vector.load %arg4[%c0_48, %c0_49] : memref<2x1xf32, #tpu.memory_space<vmem>>, vector<2x1xf32>
    tpu.vector_store %arg4[%c0_48, %c0_49], %113 {strides = array<i32>} : memref<2x1xf32, #tpu.memory_space<vmem>>, vector<2x1xf32>,
    return
  }
}

</mosaic_0001>

<llo_original>
// kernel: tpu_custom_call.1
$region0: #{tpu_custom_call.1}
  #allocation0 [shape = 'u32[]', space=smem, size = 0x4, offset = 0x4, fixed_abs, tag = 'smem constant byte address 0x4 - core index']
  #allocation1 [shape = 'u32[144,128]{1,0:T(1,128)}', space=vmem, size = 0x12000, scoped, tag = 'internal scratch']
  %s0 = inlined_call_operand.hbm [shape: f32[16], index: 0, kind: input, shape index: {}]
  %s1 = inlined_call_operand.hbm [shape: f32[2,8,256], index: 1, kind: input, shape index: {}]
  %s2 = inlined_call_operand.hbm [shape: f32[2,4,256], index: 2, kind: input, shape index: {}]
  %s3 = inlined_call_operand.hbm [shape: f32[258,128], index: 3, kind: input, shape index: {}]
  %s4 = inlined_call_operand.vmem [shape: f32[2,1], index: 4, kind: output, shape index: {}]
  %s5 = sld [smem:[#allocation0]]
  $region42: #{tpu_custom_call.1} parent=0
    _
  %s7 = ssub.s32 1, %s5
  %s8 = scalar_select 0, %s7, %s5
  $region1: #{tpu_custom_call.1} parent=0
    #allocation2 [shape = 'u8[512]{0}', space=smem, size = 0x200, scoped, tag = 'input window, operand 0, single buffered']
    #allocation3 [shape = 's32[1]{0}', space=sflag, size = 0x4, scoped, tag = 'scoped memory for tpu_custom_call.1']
    #allocation4 [shape = 's32[1]{0}', space=sflag, size = 0x4, scoped, tag = 'scoped memory for tpu_custom_call.1']
    #allocation5 [shape = 'u8[16384]{0}', space=vmem, size = 0x4000, scoped, tag = 'input window, operand 1, single buffered']
    #allocation6 [shape = 'u8[8192]{0}', space=vmem, size = 0x2000, scoped, tag = 'input window, operand 2, single buffered']
    #allocation7 [shape = 's32[1]{0}', space=sflag, size = 0x4, scoped, tag = 'scoped memory for tpu_custom_call.1']
    #allocation8 [shape = 'u8[135168]{0}', space=vmem, size = 0x21000, scoped, tag = 'input window, operand 3, single buffered']
    %9 = vsyncpa [#allocation4], 0
    %10 = vsyncpa [#allocation3], 0
    %11 = vsyncpa [#allocation7], 0
    // Predicated region
    $region2: #{tpu_custom_call.1} parent=1 // pred_check
      _
    $region3: #{tpu_custom_call.1} parent=1 // pred_check_branch
      %13 = sbr.rel (0) target = $region5
    $region4: #{tpu_custom_call.1} parent=1 // pred_region
      %s15 = ssub.s32 16, 16
      %16 = vsyncadd [#allocation4], %s15
      %19 = dma.hbm_to_smem %s0, 16, [#allocation2], [#allocation4]
    $region5: #{tpu_custom_call.1} parent=1 // pred_fallthru
      _
    // Predicated region
    $region6: #{tpu_custom_call.1} parent=1 // pred_check
      _
    $region7: #{tpu_custom_call.1} parent=1 // pred_check_branch
      %21 = sbr.rel (0) target = $region9
    $region8: #{tpu_custom_call.1} parent=1 // pred_region
      %s23 = ssub.s32 512, 512
      %24 = vsyncadd [#allocation3], %s23
      %s25 = sshll.u32 [#allocation5], 4
      %s26 = int_to_ptr.vmem [resolvable:$true] %s25
      %31 = dma.hbm_to_vmem [thread:$0]  %s1, 512, %s26, [#allocation3], 256, 256, 16
    $region9: #{tpu_custom_call.1} parent=1 // pred_fallthru
      _
    // Predicated region
    $region10: #{tpu_custom_call.1} parent=1 // pred_check
      _
    $region11: #{tpu_custom_call.1} parent=1 // pred_check_branch
      %33 = sbr.rel (0) target = $region13
    $region12: #{tpu_custom_call.1} parent=1 // pred_region
      %s35 = ssub.s32 256, 256
      %36 = vsyncadd [#allocation7], %s35
      %s37 = sshll.u32 [#allocation6], 4
      %s38 = int_to_ptr.vmem [resolvable:$true] %s37
      %43 = dma.hbm_to_vmem [thread:$0]  %s2, 256, %s38, [#allocation7], 128, 128, 8
    $region13: #{tpu_custom_call.1} parent=1 // pred_fallthru
      _
    // Predicated region
    $region14: #{tpu_custom_call.1} parent=1 // pred_check
      _
    $region15: #{tpu_custom_call.1} parent=1 // pred_check_branch
      %45 = sbr.rel (0) target = $region17
    $region16: #{tpu_custom_call.1} parent=1 // pred_region
      %s47 = ssub.s32 4224, 4224
      %48 = vsyncadd [#allocation7], %s47
      %s49 = sshll.u32 [#allocation8], 4
      %s50 = int_to_ptr.vmem [resolvable:$true] %s49
      %55 = dma.hbm_to_vmem [thread:$0]  %s3, 4224, %s50, [#allocation7], 128, 128, 8
    $region17: #{tpu_custom_call.1} parent=1 // pred_fallthru
      _
    // Predicated region
    $region18: #{tpu_custom_call.1} parent=1 // pred_check
      _
    $region19: #{tpu_custom_call.1} parent=1 // pred_check_branch
      %57 = sbr.rel (0) target = $region21
    $region20: #{tpu_custom_call.1} parent=1 // pred_region
      %58 = dma.done [#allocation4], 16
    $region21: #{tpu_custom_call.1} parent=1 // pred_fallthru
      _
    // Predicated region
    $region22: #{tpu_custom_call.1} parent=1 // pred_check
      _
    $region23: #{tpu_custom_call.1} parent=1 // pred_check_branch
      %60 = sbr.rel (0) target = $region25
    $region24: #{tpu_custom_call.1} parent=1 // pred_region
      %61 = dma.done [#allocation3], 512
    $region25: #{tpu_custom_call.1} parent=1 // pred_fallthru
      _
    // Predicated region
    $region26: #{tpu_custom_call.1} parent=1 // pred_check
      _
    $region27: #{tpu_custom_call.1} parent=1 // pred_check_branch
      %63 = sbr.rel (0) target = $region29
    $region28: #{tpu_custom_call.1} parent=1 // pred_region
      %64 = dma.done [#allocation7], 256
    $region29: #{tpu_custom_call.1} parent=1 // pred_fallthru
      _
    // Predicated region
    $region30: #{tpu_custom_call.1} parent=1 // pred_check
      _
    $region31: #{tpu_custom_call.1} parent=1 // pred_check_branch
      %66 = sbr.rel (0) target = $region33
    $region32: #{tpu_custom_call.1} parent=1 // pred_region
      %67 = dma.done [#allocation7], 4224
    $region33: #{tpu_custom_call.1} parent=1 // pred_fallthru
      _
    %68 = sfence
    %s69 = sld [smem:[#allocation2]]
    %s70 = sld [smem:[#allocation2 + $0x1]]
    %s71 = sld [smem:[#allocation2 + $0x2]]
    %v72 = vld [vmem:[#allocation5] ss:$8 sm:$0x3]
    %s73 = scalar_lea.vmem [#allocation5], 16
    %v74 = vld [vmem:[%s73] ss:$8 sm:$0x3]
    %s75 = sld [smem:[#allocation2 + $0x4]]
    %v76 = vstv %s75
    %v77 = vmul.f32 %v72, %v76
    %v78 = vmul.f32 %v74, %v76
    %s79 = scalar_lea.vmem [#allocation5], 1
    %v80 = vld [vmem:[%s79] ss:$8 sm:$0x3]
    %s81 = scalar_lea.vmem [#allocation5], 17
    %v82 = vld [vmem:[%s81] ss:$8 sm:$0x3]
    %s83 = sld [smem:[#allocation2 + $0x5]]
    %v84 = vstv %s83
    %v85 = vmul.f32 %v80, %v84
    %v86 = vmul.f32 %v82, %v84
    %v87 = vadd.f32 %v77, %v85
    %v88 = vadd.f32 %v78, %v86
    %s89 = scalar_lea.vmem [#allocation5], 2
    %v90 = vld [vmem:[%s89] ss:$8 sm:$0x3]
    %s91 = scalar_lea.vmem [#allocation5], 18
    %v92 = vld [vmem:[%s91] ss:$8 sm:$0x3]
    %s93 = sld [smem:[#allocation2 + $0x6]]
    %v94 = vstv %s93
    %v95 = vmul.f32 %v90, %v94
    %v96 = vmul.f32 %v92, %v94
    %v97 = vadd.f32 %v87, %v95
    %v98 = vadd.f32 %v88, %v96
    %s99 = scalar_lea.vmem [#allocation5], 3
    %v100 = vld [vmem:[%s99] ss:$8 sm:$0x3]
    %s101 = scalar_lea.vmem [#allocation5], 19
    %v102 = vld [vmem:[%s101] ss:$8 sm:$0x3]
    %s103 = sld [smem:[#allocation2 + $0x7]]
    %v104 = vstv %s103
    %v105 = vmul.f32 %v100, %v104
    %v106 = vmul.f32 %v102, %v104
    %v107 = vadd.f32 %v97, %v105
    %v108 = vadd.f32 %v98, %v106
    %s109 = scalar_lea.vmem [#allocation5], 4
    %v110 = vld [vmem:[%s109] ss:$8 sm:$0x3]
    %s111 = scalar_lea.vmem [#allocation5], 20
    %v112 = vld [vmem:[%s111] ss:$8 sm:$0x3]
    %s113 = sld [smem:[#allocation2 + $0x8]]
    %v114 = vstv %s113
    %v115 = vmul.f32 %v110, %v114
    %v116 = vmul.f32 %v112, %v114
    %v117 = vadd.f32 %v107, %v115
    %v118 = vadd.f32 %v108, %v116
    %s119 = scalar_lea.vmem [#allocation5], 5
    %v120 = vld [vmem:[%s119] ss:$8 sm:$0x3]
    %s121 = scalar_lea.vmem [#allocation5], 21
    %v122 = vld [vmem:[%s121] ss:$8 sm:$0x3]
    %s123 = sld [smem:[#allocation2 + $0x9]]
    %v124 = vstv %s123
    %v125 = vmul.f32 %v120, %v124
    %v126 = vmul.f32 %v122, %v124
    %v127 = vadd.f32 %v117, %v125
    %v128 = vadd.f32 %v118, %v126
    %s129 = scalar_lea.vmem [#allocation5], 6
    %v130 = vld [vmem:[%s129] ss:$8 sm:$0x3]
    %s131 = scalar_lea.vmem [#allocation5], 22
    %v132 = vld [vmem:[%s131] ss:$8 sm:$0x3]
    %s133 = sld [smem:[#allocation2 + $0xa]]
    %v134 = vstv %s133
    %v135 = vmul.f32 %v130, %v134
    %v136 = vmul.f32 %v132, %v134
    %v137 = vadd.f32 %v127, %v135
    %v138 = vadd.f32 %v128, %v136
    %s139 = scalar_lea.vmem [#allocation5], 7
    %v140 = vld [vmem:[%s139] ss:$8 sm:$0x3]
    %s141 = scalar_lea.vmem [#allocation5], 23
    %v142 = vld [vmem:[%s141] ss:$8 sm:$0x3]
    %s143 = sld [smem:[#allocation2 + $0xb]]
    %v144 = vstv %s143
    %v145 = vmul.f32 %v140, %v144
    %v146 = vmul.f32 %v142, %v144
    %v147 = vadd.f32 %v137, %v145
    %v148 = vadd.f32 %v138, %v146
    %v149 = vld [vmem:[#allocation6] ss:$4 sm:$0x3]
    %s150 = scalar_lea.vmem [#allocation6], 8
    %v151 = vld [vmem:[%s150] ss:$4 sm:$0x3]
    %s152 = sld [smem:[#allocation2 + $0xc]]
    %v153 = vstv %s152
    %v154 = vmul.f32 %v149, %v153
    %v155 = vmul.f32 %v151, %v153
    %v156 = vadd.f32 %v147, %v154
    %v157 = vadd.f32 %v148, %v155
    %s158 = scalar_lea.vmem [#allocation6], 1
    %v159 = vld [vmem:[%s158] ss:$4 sm:$0x3]
    %s160 = scalar_lea.vmem [#allocation6], 9
    %v161 = vld [vmem:[%s160] ss:$4 sm:$0x3]
    %s162 = sld [smem:[#allocation2 + $0xd]]
    %v163 = vstv %s162
    %v164 = vmul.f32 %v159, %v163
    %v165 = vmul.f32 %v161, %v163
    %v166 = vadd.f32 %v156, %v164
    %v167 = vadd.f32 %v157, %v165
    %s168 = scalar_lea.vmem [#allocation6], 2
    %v169 = vld [vmem:[%s168] ss:$4 sm:$0x3]
    %s170 = scalar_lea.vmem [#allocation6], 10
    %v171 = vld [vmem:[%s170] ss:$4 sm:$0x3]
    %s172 = sld [smem:[#allocation2 + $0xe]]
    %v173 = vstv %s172
    %v174 = vmul.f32 %v169, %v173
    %v175 = vmul.f32 %v171, %v173
    %v176 = vadd.f32 %v166, %v174
    %v177 = vadd.f32 %v167, %v175
    %s178 = scalar_lea.vmem [#allocation6], 3
    %v179 = vld [vmem:[%s178] ss:$4 sm:$0x3]
    %s180 = scalar_lea.vmem [#allocation6], 11
    %v181 = vld [vmem:[%s180] ss:$4 sm:$0x3]
    %s182 = sld [smem:[#allocation2 + $0xf]]
    %v183 = vstv %s182
    %v184 = vmul.f32 %v179, %v183
    %v185 = vmul.f32 %v181, %v183
    %v186 = vadd.f32 %v176, %v184
    %v187 = vadd.f32 %v177, %v185
    %v190 = vcombine.low %v186, %v187
    %v192 = vunpack.c.l.s4 1966171168
    %v193 = vunpack.c.0.s8 %v192
    %v194 = vlaneseq
    %v195 = vshrl.u32 %v194, 7
    %v196 = vsub.s32 %v193, %v195
    %v197 = vrot.slane %v190, %v196
    %v198 = vcombine.high %v197, %v197
    %v200 = vunpack.c.l.s4 1966171168
    %v201 = vunpack.c.0.s8 %v200
    %v202 = vlaneseq
    %v203 = vshrl.u32 %v202, 7
    %v204 = vsub.s32 %v201, %v203
    %v205 = vrot.slane %v197, %v204
    %v207 = vunpack.c.l.s4 1966171168
    %v208 = vunpack.c.0.s8 %v207
    %v209 = vlaneseq
    %v210 = vshrl.u32 %v209, 7
    %v211 = vsub.s32 %v208, %v210
    %v212 = vrot.slane %v198, %v211
    %vm215 = vcmask 1041408
    %v216 = vsel %vm215, %v205, 0.0
    %v217 = vsel %vm215, %v212, 0.0
    %v218 = vadd.f32 %v216, %v217
    %219 = vadd.xlane.f32.xlu0 %v218
    %v220 = vpop.xlane.xlu0 %219
    %v221 = vrot.slane %v220, 4
    %v222 = vadd.f32 %v220, %v221
    %v223 = vrot.slane %v222, 2
    %v224 = vadd.f32 %v222, %v223
    %v225 = vrot.slane %v224, 1
    %v226 = vadd.f32 %v224, %v225
    %s227 = vtos %v226
    %v228 = vrcp.pop 512.0
    %s229 = vtos %v228
    %s230 = smul.f32 %s227, %s229
    %v231 = vstv %s230
    %v232 = vsub.f32 %v186, %v231
    %v233 = vsub.f32 %v187, %v231
    %v234 = vmul.f32 %v232, %v232
    %v235 = vmul.f32 %v233, %v233
    %v238 = vcombine.low %v234, %v235
    %v240 = vunpack.c.l.s4 1966171168
    %v241 = vunpack.c.0.s8 %v240
    %v242 = vlaneseq
    %v243 = vshrl.u32 %v242, 7
    %v244 = vsub.s32 %v241, %v243
    %v245 = vrot.slane %v238, %v244
    %v246 = vcombine.high %v245, %v245
    %v248 = vunpack.c.l.s4 1966171168
    %v249 = vunpack.c.0.s8 %v248
    %v250 = vlaneseq
    %v251 = vshrl.u32 %v250, 7
    %v252 = vsub.s32 %v249, %v251
    %v253 = vrot.slane %v245, %v252
    %v255 = vunpack.c.l.s4 1966171168
    %v256 = vunpack.c.0.s8 %v255
    %v257 = vlaneseq
    %v258 = vshrl.u32 %v257, 7
    %v259 = vsub.s32 %v256, %v258
    %v260 = vrot.slane %v246, %v259
    %v263 = vsel %vm215, %v253, 0.0
    %v264 = vsel %vm215, %v260, 0.0
    %v265 = vadd.f32 %v263, %v264
    %266 = vadd.xlane.f32.xlu0 %v265
    %v267 = vpop.xlane.xlu0 %266
    %v268 = vrot.slane %v267, 4
    %v269 = vadd.f32 %v267, %v268
    %v270 = vrot.slane %v269, 2
    %v271 = vadd.f32 %v269, %v270
    %v272 = vrot.slane %v271, 1
    %v273 = vadd.f32 %v271, %v272
    %s274 = vtos %v273
    %v275 = vrcp.pop 512.0
    %s276 = vtos %v275
    %s277 = smul.f32 %s274, %s276
    %s278 = sadd.f32 %s277, 1e-05
    %v279 = vstv %s278
    %v280 = vrsqrt.pop %v279
    %s281 = vtos %v280
    %s282 = smul.f32 %s69, %s281
    %v283 = vstv %s282
    %v284 = vmul.f32 %v232, %v283
    %v285 = vmul.f32 %v233, %v283
    %v286 = vstv %s70
    %v287 = vadd.f32 %v284, %v286
    %v288 = vadd.f32 %v285, %v286
    %v289 = vld [vmem:[#allocation8] sm:$0xff]
    %v290 = vld [vmem:[#allocation8 + $0x8] sm:$0xff]
    %v291 = vld [vmem:[#allocation8 + $0x10] sm:$0xff]
    %v292 = vld [vmem:[#allocation8 + $0x18] sm:$0xff]
    %v293 = vld [vmem:[#allocation8 + $0x20] sm:$0xff]
    %v294 = vld [vmem:[#allocation8 + $0x28] sm:$0xff]
    %v295 = vld [vmem:[#allocation8 + $0x30] sm:$0xff]
    %v296 = vld [vmem:[#allocation8 + $0x38] sm:$0xff]
    %v297 = vld [vmem:[#allocation8 + $0x40] sm:$0xff]
    %v298 = vld [vmem:[#allocation8 + $0x48] sm:$0xff]
    %v299 = vld [vmem:[#allocation8 + $0x50] sm:$0xff]
    %v300 = vld [vmem:[#allocation8 + $0x58] sm:$0xff]
    %v301 = vld [vmem:[#allocation8 + $0x60] sm:$0xff]
    %v302 = vld [vmem:[#allocation8 + $0x68] sm:$0xff]
    %v303 = vld [vmem:[#allocation8 + $0x70] sm:$0xff]
    %v304 = vld [vmem:[#allocation8 + $0x78] sm:$0xff]
    %v305 = vld [vmem:[#allocation8 + $0x80] sm:$0xff]
    %v306 = vld [vmem:[#allocation8 + $0x88] sm:$0xff]
    %v307 = vld [vmem:[#allocation8 + $0x90] sm:$0xff]
    %v308 = vld [vmem:[#allocation8 + $0x98] sm:$0xff]
    %v309 = vld [vmem:[#allocation8 + $0xa0] sm:$0xff]
    %v310 = vld [vmem:[#allocation8 + $0xa8] sm:$0xff]
    %v311 = vld [vmem:[#allocation8 + $0xb0] sm:$0xff]
    %v312 = vld [vmem:[#allocation8 + $0xb8] sm:$0xff]
    %v313 = vld [vmem:[#allocation8 + $0xc0] sm:$0xff]
    %v314 = vld [vmem:[#allocation8 + $0xc8] sm:$0xff]
    %v315 = vld [vmem:[#allocation8 + $0xd0] sm:$0xff]
    %v316 = vld [vmem:[#allocation8 + $0xd8] sm:$0xff]
    %v317 = vld [vmem:[#allocation8 + $0xe0] sm:$0xff]
    %v318 = vld [vmem:[#allocation8 + $0xe8] sm:$0xff]
    %v319 = vld [vmem:[#allocation8 + $0xf0] sm:$0xff]
    %v320 = vld [vmem:[#allocation8 + $0xf8] sm:$0xff]
    %v321 = vld [vmem:[#allocation8 + $0x100] sm:$0x1]
    %v322 = vlaneseq
    %v323 = vshrl.u32 %v322, 7
    %v324 = vsub.s32 0, %v323
    %v325 = vrot.slane %v321, %v324
    %v328 = vcombine.low %v287, %v288
    %v330 = vunpack.c.l.s4 1966171168
    %v331 = vunpack.c.0.s8 %v330
    %v332 = vlaneseq
    %v333 = vshrl.u32 %v332, 7
    %v334 = vsub.s32 %v331, %v333
    %v335 = vrot.slane %v328, %v334
    %v336 = vcombine.high %v335, %v335
    %v338 = vunpack.c.l.s4 1966171168
    %v339 = vunpack.c.0.s8 %v338
    %v340 = vlaneseq
    %v341 = vshrl.u32 %v340, 7
    %v342 = vsub.s32 %v339, %v341
    %v343 = vrot.slane %v335, %v342
    %v345 = vunpack.c.l.s4 1966171168
    %v346 = vunpack.c.0.s8 %v345
    %v347 = vlaneseq
    %v348 = vshrl.u32 %v347, 7
    %v349 = vsub.s32 %v346, %v348
    %v350 = vrot.slane %v336, %v349
    %353 = vmatprep.subr.mxu0 0.0
    %354 = vmatpush1.msra.mxu0 %v304
    %355 = vmatprep.subr.mxu0 0.0
    %356 = vmatpush1.msra.mxu0 %v303
    %357 = vmatprep.subr.mxu0 0.0
    %358 = vmatpush1.msra.mxu0 %v302
    %359 = vmatprep.subr.mxu0 0.0
    %360 = vmatpush1.msra.mxu0 %v301
    %361 = vmatprep.subr.mxu0 0.0
    %362 = vmatpush1.msra.mxu0 %v300
    %363 = vmatprep.subr.mxu0 0.0
    %364 = vmatpush1.msra.mxu0 %v299
    %365 = vmatprep.subr.mxu0 0.0
    %366 = vmatpush1.msra.mxu0 %v298
    %367 = vmatprep.subr.mxu0 0.0
    %368 = vmatpush1.msra.mxu0 %v297
    %369 = vmatprep.subr.mxu0 0.0
    %370 = vmatpush1.msra.mxu0 %v296
    %371 = vmatprep.subr.mxu0 0.0
    %372 = vmatpush1.msra.mxu0 %v295
    %373 = vmatprep.subr.mxu0 0.0
    %374 = vmatpush1.msra.mxu0 %v294
    %375 = vmatprep.subr.mxu0 0.0
    %376 = vmatpush1.msra.mxu0 %v293
    %377 = vmatprep.subr.mxu0 0.0
    %378 = vmatpush1.msra.mxu0 %v292
    %379 = vmatprep.subr.mxu0 0.0
    %380 = vmatpush1.msra.mxu0 %v291
    %381 = vmatprep.subr.mxu0 0.0
    %382 = vmatpush1.msra.mxu0 %v290
    %383 = vmatprep.subr.mxu0 0.0
    %384 = vmatpush1.msra.mxu0 %v289
    %385 = vmatprep.subr.mxu0 0.0
    %386 = vmatpush2.msra.mxu0 %v320
    %387 = vmatprep.subr.mxu0 0.0
    %388 = vmatpush2.msra.mxu0 %v319
    %389 = vmatprep.subr.mxu0 0.0
    %390 = vmatpush2.msra.mxu0 %v318
    %391 = vmatprep.subr.mxu0 0.0
    %392 = vmatpush2.msra.mxu0 %v317
    %393 = vmatprep.subr.mxu0 0.0
    %394 = vmatpush2.msra.mxu0 %v316
    %395 = vmatprep.subr.mxu0 0.0
    %396 = vmatpush2.msra.mxu0 %v315
    %397 = vmatprep.subr.mxu0 0.0
    %398 = vmatpush2.msra.mxu0 %v314
    %399 = vmatprep.subr.mxu0 0.0
    %400 = vmatpush2.msra.mxu0 %v313
    %401 = vmatprep.subr.mxu0 0.0
    %402 = vmatpush2.msra.mxu0 %v312
    %403 = vmatprep.subr.mxu0 0.0
    %404 = vmatpush2.msra.mxu0 %v311
    %405 = vmatprep.subr.mxu0 0.0
    %406 = vmatpush2.msra.mxu0 %v310
    %407 = vmatprep.subr.mxu0 0.0
    %408 = vmatpush2.msra.mxu0 %v309
    %409 = vmatprep.subr.mxu0 0.0
    %410 = vmatpush2.msra.mxu0 %v308
    %411 = vmatprep.subr.mxu0 0.0
    %412 = vmatpush2.msra.mxu0 %v307
    %413 = vmatprep.subr.mxu0 0.0
    %414 = vmatpush2.msra.mxu0 %v306
    %415 = vmatprep.subr.mxu0 0.0
    %416 = vmatpush2.msra.mxu0 %v305
    %417 = vmatprep.mubr.f32.mxu0 %v350
    %418 = vmatmul.mubr.f32.gmra.mxu0 %v343
    %v419 = vpop.f32.mrf.mxu0
    %v420 = vadd.f32 %v325, %v419
    %v421 = vpop.f32.mrf.mxu0
    %422 = vdwg.mxu0
    %v423 = vmax.f32 %v420, 0.0
    %v424 = vld [vmem:[#allocation8 + $0x101] sm:$0x1]
    %v425 = vlaneseq
    %v426 = vshrl.u32 %v425, 7
    %v427 = vsub.s32 0, %v426
    %v428 = vrot.slane %v424, %v427
    %v429 = vmul.f32 %v423, %v428
    %v430 = vsel %vm215, %v429, 0.0
    %431 = vadd.xlane.f32.xlu0 %v430
    %v432 = vpop.xlane.xlu0 %431
    %v433 = vstv %s71
    %v434 = vadd.f32 %v432, %v433
    %v435 = vsub.f32 0.0, %v434
    %v436 = vmul.f32 %v435, 1.442695
    %v437 = vpow.pop %v436
    %v438 = vadd.f32 %v437, 1.0
    %v439 = vrcp.pop %v438
    %vm440 = vcmask 1024
    %441 = vst.msk [vmem:[%s4] sm:$0x3] %vm440, %v439
    // Predicated region
    $region34: #{tpu_custom_call.1} parent=1 // pred_check
      _
    $region35: #{tpu_custom_call.1} parent=1 // pred_check_branch
      %443 = sbr.rel (0) target = $region37
    $region36: #{tpu_custom_call.1} parent=1 // pred_region
      _
    $region37: #{tpu_custom_call.1} parent=1 // pred_fallthru
      _
    // Predicated region
    $region38: #{tpu_custom_call.1} parent=1 // pred_check
      _
    $region39: #{tpu_custom_call.1} parent=1 // pred_check_branch
      %445 = sbr.rel (0) target = $region41
    $region40: #{tpu_custom_call.1} parent=1 // pred_region
      _
    $region41: #{tpu_custom_call.1} parent=1 // pred_fallthru
      _
    %446 = vsyncpa [#allocation3], 1
    %447 = vsyncpa [#allocation7], 1
    %448 = vsyncpa [#allocation4], 1

</llo_original>
